<compile_context>
chip_gen: v5e
topology: v5e:2x2
jax: 0.10.0
libtpu: 0.0.40
codegen_flags: <defaults>
</compile_context>

<pallas_src>
import jax
import jax.numpy as jnp
from jax.experimental import pallas as pl
from jax.experimental.pallas import tpu as pltpu


# ----------------------------------------------------------------------------
# VMEM budgeting (generation-aware)
# ----------------------------------------------------------------------------
def _vmem_params():
    """Return (tile_budget_bytes, vmem_limit_cap_bytes) for this TPU generation."""
    cap = 64 * 1024 * 1024  # conservative default == v7x per-core physical VMEM
    try:
        info = pltpu.get_tpu_info()
        cap = int(getattr(info, "vmem_capacity_bytes", cap)) or cap
    except Exception:  # e.g. interpret mode / unusual backend
        pass
    if cap >= 96 * 1024 * 1024:
        # v5e / v6e: 128 MiB physical -> use most of it.
        return 96 * 1024 * 1024, min(cap - 16 * 1024 * 1024, 112 * 1024 * 1024)
    # v7x: 64 MiB physical -> leave headroom for Mosaic internal scratch.
    return 48 * 1024 * 1024, 56 * 1024 * 1024


def _round_down(v, g):
    return (v // g) * g


def _pick_tile_m(M, cap, per_row_bytes, fixed_bytes, budget, min_grid_steps=4):
    """Pick an MXU/DMA-friendly row tile that fits the VMEM budget."""
    # Keep >= min_grid_steps steps on the parallel M axis (v7x has 2 TCs
    # sharding it; also gives DMA/compute overlap) as long as tiles stay
    # >= 256 rows (full MXU passes on v6e/v7x).
    if M // min_grid_steps >= 256:
        cap = min(cap, _round_down(M // min_grid_steps, 256))
    tm = min(cap, M)
    if tm < M:
        if tm >= 256:
            tm = _round_down(tm, 256)
        elif tm >= 128:
            tm = _round_down(tm, 128)
        else:
            tm = max(16, _round_down(tm, 16))
    while tm > 16 and fixed_bytes + tm * per_row_bytes > budget:
        nt = tm // 2
        if nt >= 256:
            nt = _round_down(nt, 256)
        elif nt >= 128:
            nt = _round_down(nt, 128)
        else:
            nt = max(16, _round_down(nt, 16))
        if nt == tm:
            break
        tm = nt
    return max(1, tm)


def _pick_nk_tile(Hp, w_sz, budget, prefs=(1024, 512, 256, 128)):
    """Largest lane-aligned tile dividing Hp whose double-buffered W tile fits."""
    for t in prefs:
        if Hp % t == 0 and 2 * t * t * w_sz <= budget // 3:
            return t
    return 128  # Hp is always a multiple of 128 when this is called


# ----------------------------------------------------------------------------
# Kernels
# ----------------------------------------------------------------------------
def _skip_linear_resident_kernel(x_ref, w_ref, b_ref, o_ref):
    """Path A: full-H blocks; weight + bias resident in VMEM.

    x_ref: (tm, H), w_ref: (H, H), b_ref: (1, H), o_ref: (tm, H)
    """
    x = x_ref[...]
    # Native-dtype MXU matmul, f32 accumulation.
    y = jnp.dot(x, w_ref[...], preferred_element_type=jnp.float32)
    # One upcast of x for the residual; bias broadcast over rows.
    y = y + b_ref[...].astype(jnp.float32) + x.astype(jnp.float32)
    o_ref[...] = y.astype(o_ref.dtype)


def _skip_linear_tiled_kernel(x_ref, w_ref, b_ref, o_ref, acc_ref):
    """Path B: 3-D (M, N, K) grid with f32 accumulator scratch.

    x_ref:  (tm, tk)  matmul operand, indexed (i, k)   [also the residual at k==j]
    w_ref:  (tk, tn)  weight tile,    indexed (k, j)
    b_ref:  (1,  tn)  bias tile,      indexed (0, j)
    o_ref:  (tm, tn)  output tile,    indexed (i, j)
    acc_ref:(tm, tn)  f32 accumulator (VMEM scratch)
    """
    j = pl.program_id(1)
    k = pl.program_id(2)

    @pl.when(k == 0)
    def _init():
        acc_ref[...] = jnp.zeros_like(acc_ref)

    acc_ref[...] += jnp.dot(x_ref[...], w_ref[...],
                            preferred_element_type=jnp.float32)

    # Residual: tk == tn, so the x matmul tile at k == j IS the (i, j)
    # residual tile -> fold it into the accumulator (no extra HBM stream).
    @pl.when(k == j)
    def _residual():
        acc_ref[...] += x_ref[...].astype(jnp.float32)

    @pl.when(k == pl.num_programs(2) - 1)
    def _finalize():
        o_ref[...] = (acc_ref[...]
                      + b_ref[...].astype(jnp.float32)).astype(o_ref.dtype)


# ----------------------------------------------------------------------------
# Path runners
# ----------------------------------------------------------------------------
def _run_resident(x2d, w, b2d, *, tm, vmem_limit, cost, single_buffer):
    M, H = x2d.shape

    def const_spec(shape):
        # Constant index_map -> block never changes; single-buffer to halve
        # the resident footprint when the API supports it.
        if single_buffer and hasattr(pl, "Buffered"):
            return pl.BlockSpec(shape, lambda i: (0, 0),
                                pipeline_mode=pl.Buffered(1))
        return pl.BlockSpec(shape, lambda i: (0, 0))

    return pl.pallas_call(
        _skip_linear_resident_kernel,
        out_shape=jax.ShapeDtypeStruct((M, H), x2d.dtype),
        grid_spec=pltpu.PrefetchScalarGridSpec(
            num_scalar_prefetch=0,
            grid=(pl.cdiv(M, tm),),
            in_specs=[
                pl.BlockSpec((tm, H), lambda i: (i, 0)),  # x tile (pipelined)
                const_spec((H, H)),                       # W resident
                const_spec((1, H)),                       # bias resident
            ],
            out_specs=pl.BlockSpec((tm, H), lambda i: (i, 0)),
        ),
        compiler_params=pltpu.CompilerParams(
            dimension_semantics=("parallel",),            # megacore on v7x
            vmem_limit_bytes=vmem_limit),
        cost_estimate=cost,
    )(x2d, w, b2d)


# ----------------------------------------------------------------------------
# Wrapper
# ----------------------------------------------------------------------------
def skip_connection_linear(x, w, b, *, tile_m_cap=1024, force_tiled=False):
    """out = x + x @ w + b  with x: (..., H), w: (H_in, H_out)=(H, H), b: (H,)."""
    orig_shape = x.shape
    H = orig_shape[-1]
    M = 1
    for d in orig_shape[:-1]:
        M *= d
    assert w.shape == (H, H) and b.shape == (H,)

    x2d = x.reshape(M, H)
    b2d = b.reshape(1, H)
    out_dtype = x.dtype

    in_sz = jnp.dtype(x.dtype).itemsize
    w_sz = jnp.dtype(w.dtype).itemsize
    out_sz = jnp.dtype(out_dtype).itemsize

    budget, limit_cap = _vmem_params()

    # Resident fast path is sized assuming a single weight copy (Buffered(1)).
    w_buf = 1 if hasattr(pl, "Buffered") else 2
    use_tiled = force_tiled or (w_buf * H * H * w_sz > budget // 2)

    if not use_tiled:
        # ---------------- Path A: weight resident, tile only M ---------------
        per_row = 2 * H * in_sz + 2 * H * out_sz + 2 * H * 4  # x/out dbl-buf + f32 tmp
        fixed = w_buf * H * H * w_sz + 2 * H * 4              # W + bias
        tm = _pick_tile_m(M, tile_m_cap, per_row, fixed, budget)
        vmem_est = fixed + tm * per_row
        vmem_limit = int(min(limit_cap,
                             max(32 * 1024 * 1024, vmem_est + 8 * 1024 * 1024)))
        cost = pl.CostEstimate(
            flops=2 * M * H * H,
            transcendentals=0,
            bytes_accessed=M * H * in_sz + H * H * w_sz + H * 4 + M * H * out_sz)
        try:
            out2d = _run_resident(x2d, w, b2d, tm=tm, vmem_limit=vmem_limit,
                                  cost=cost, single_buffer=True)
        except Exception:
            # Fallback if this JAX/Mosaic build rejects pipeline_mode=Buffered(1).
            out2d = _run_resident(x2d, w, b2d, tm=tm, vmem_limit=vmem_limit,
                                  cost=cost, single_buffer=False)
        return out2d.reshape(orig_shape)

    # ------------------ Path B: 3-D grid with K/N tiling ---------------------
    # Pad H to a multiple of 128: lane-dense (unmasked) stores and bounded
    # W tiles for any H.  Padded rows/cols are zero, so they contribute
    # nothing and are sliced off at the end.
    Hp = ((H + 127) // 128) * 128
    if Hp != H:
        x2d = jnp.pad(x2d, ((0, 0), (0, Hp - H)))
        w = jnp.pad(w, ((0, Hp - H), (0, Hp - H)))
        b2d = jnp.pad(b2d, ((0, 0), (0, Hp - H)))

    t = _pick_nk_tile(Hp, w_sz, budget)
    tn = tk = t  # equal so the residual can be folded at k == j
    per_row = (2 * tk * in_sz      # x matmul tiles (dbl-buffered)
               + 2 * tn * out_sz   # out tiles
               + 2 * tn * 4)       # f32 accumulator + finalize temp
    fixed = 2 * tk * tn * w_sz + 2 * tn * 4
    tm = _pick_tile_m(M, tile_m_cap, per_row, fixed, budget)
    vmem_est = fixed + tm * per_row
    vmem_limit = int(min(limit_cap,
                         max(32 * 1024 * 1024, vmem_est + 8 * 1024 * 1024)))

    grid_m = pl.cdiv(M, tm)
    cost = pl.CostEstimate(
        flops=2 * M * Hp * Hp,
        transcendentals=0,
        bytes_accessed=(M * Hp * in_sz) * (Hp // tn)   # x re-read per N tile
                       + (Hp * Hp * w_sz) * grid_m     # W re-read per M tile
                       + Hp * 4                        # bias
                       + M * Hp * out_sz)              # output write

    out2d = pl.pallas_call(
        _skip_linear_tiled_kernel,
        out_shape=jax.ShapeDtypeStruct((M, Hp), out_dtype),
        grid_spec=pltpu.PrefetchScalarGridSpec(
            num_scalar_prefetch=0,
            grid=(grid_m, Hp // tn, Hp // tk),
            in_specs=[
                pl.BlockSpec((tm, tk), lambda i, j, k: (i, k)),  # x (matmul + residual)
                pl.BlockSpec((tk, tn), lambda i, j, k: (k, j)),  # W
                pl.BlockSpec((1, tn), lambda i, j, k: (0, j)),   # bias
            ],
            out_specs=pl.BlockSpec((tm, tn), lambda i, j, k: (i, j)),
            scratch_shapes=[pltpu.VMEM((tm, tn), jnp.float32)],
        ),
        compiler_params=pltpu.CompilerParams(
            dimension_semantics=("parallel", "parallel", "arbitrary"),
            vmem_limit_bytes=vmem_limit),
        cost_estimate=cost,
    )(x2d, w, b2d)

    if Hp != H:
        out2d = out2d[:, :H]
    return out2d.reshape(orig_shape)


# ----------------------------------------------------------------------------
# Demo / correctness check
# ----------------------------------------------------------------------------
if __name__ == "__main__":
    def _reference(x, w, b):
        return x + (jnp.einsum("bsh,hk->bsk", x, w) + b)

    keys = jax.random.split(jax.random.PRNGKey(0), 6)

    # Case 1/2: lane-dense H (multiple of 128) -> Path A and forced Path B.
    B, S, H = 2, 8, 128
    x = jax.random.normal(keys[0], (B, S, H), dtype=jnp.float32)
    bound = 1.0 / (H ** 0.5)
    # torch nn.Linear weight layout is (out, in); kernel expects (in, out).
    w_torch = jax.random.uniform(keys[1], (H, H), minval=-bound, maxval=bound,
                                 dtype=jnp.float32)
    b = jax.random.uniform(keys[2], (H,), minval=-bound, maxval=bound,
                           dtype=jnp.float32)
    w = w_torch.T

    ref = _reference(x, w, b)
    out_a = jax.block_until_ready(skip_connection_linear(x, w, b))
    assert jnp.allclose(out_a, ref, atol=1e-5, rtol=1e-5), "path A mismatch"
    out_b = jax.block_until_ready(skip_connection_linear(x, w, b, force_tiled=True))
    assert jnp.allclose(out_b, ref, atol=1e-5, rtol=1e-5), "path B mismatch"

    # Case 3: non-128-divisible H -> exercises Path B's padding path.
    H2 = 96
    x2 = jax.random.normal(keys[3], (B, S, H2), dtype=jnp.float32)
    bound2 = 1.0 / (H2 ** 0.5)
    w2 = jax.random.uniform(keys[4], (H2, H2), minval=-bound2, maxval=bound2,
                            dtype=jnp.float32).T
    b2 = jax.random.uniform(keys[5], (H2,), minval=-bound2, maxval=bound2,
                            dtype=jnp.float32)
    ref2 = _reference(x2, w2, b2)
    out_c = jax.block_until_ready(
        skip_connection_linear(x2, w2, b2, force_tiled=True))
    assert jnp.allclose(out_c, ref2, atol=1e-5, rtol=1e-5), "padded path B mismatch"

    print("KERNEL_OK")
</pallas_src>

<mosaic_0001>
module attributes {stable_mosaic.version = 11 : i64} {
  func.func @_skip_linear_resident_kernel(%arg0: i32, %arg1: memref<16x128xf32, #tpu.memory_space<vmem>>, %arg2: memref<128x128xf32, #tpu.memory_space<vmem>>, %arg3: memref<1x128xf32, #tpu.memory_space<vmem>>, %arg4: memref<16x128xf32, #tpu.memory_space<vmem>>) attributes {dimension_semantics = [#tpu.dimension_semantics<parallel>], iteration_bounds = array<i64: 1>, scalar_prefetch = 0 : i64, scratch_operands = 0 : i64, tpu.core_type = #tpu.core_type<tc>, window_params = [{transform_indices = @transform_0, window_bounds = array<i64: 16, 128>}, {pipeline_mode = #tpu.pipeline_mode<synchronous>, transform_indices = @transform_1, window_bounds = array<i64: 128, 128>}, {pipeline_mode = #tpu.pipeline_mode<synchronous>, transform_indices = @transform_2, window_bounds = array<i64: 1, 128>}, {transform_indices = @transform_3, window_bounds = array<i64: 16, 128>}]} {
    %c0 = arith.constant 0 : index
    %c0_0 = arith.constant 0 : index
    %0 = vector.load %arg1[%c0, %c0_0] : memref<16x128xf32, #tpu.memory_space<vmem>>, vector<16x128xf32>
    %c0_1 = arith.constant 0 : index
    %c0_2 = arith.constant 0 : index
    %1 = vector.load %arg2[%c0_1, %c0_2] : memref<128x128xf32, #tpu.memory_space<vmem>>, vector<128x128xf32>
    %cst = arith.constant dense<0.000000e+00> : vector<16x128xf32>
    %2 = tpu.matmul %0, %1, %cst {dimension_numbers = #tpu.dot_dimension_numbers<[1], [0], [0], [1], [0, 0, 1, 1], [], []>} : vector<16x128xf32>, vector<128x128xf32>, vector<16x128xf32> -> vector<16x128xf32>
    %c0_3 = arith.constant 0 : index
    %c0_4 = arith.constant 0 : index
    %3 = vector.load %arg3[%c0_3, %c0_4] : memref<1x128xf32, #tpu.memory_space<vmem>>, vector<1x128xf32>
    %4 = vector.broadcast %3 : vector<1x128xf32> to vector<16x128xf32>
    %5 = arith.addf %2, %4 : vector<16x128xf32>
    %6 = arith.addf %5, %0 : vector<16x128xf32>
    %c0_5 = arith.constant 0 : index
    %c0_6 = arith.constant 0 : index
    %7 = vector.load %arg4[%c0_5, %c0_6] : memref<16x128xf32, #tpu.memory_space<vmem>>, vector<16x128xf32>
    tpu.vector_store %arg4[%c0_5, %c0_6], %6 {strides = array<i32>} : memref<16x128xf32, #tpu.memory_space<vmem>>, vector<16x128xf32>,
    return
  }
  func.func @transform_0(%arg0: i32) -> (i32, i32) {
    %c0_i32 = arith.constant 0 : i32
    %c0_i32_0 = arith.constant 0 : i32
    return %arg0, %c0_i32 : i32, i32
  }
  func.func @transform_1(%arg0: i32) -> (i32, i32) {
    %c0_i32 = arith.constant 0 : i32
    %c0_i32_0 = arith.constant 0 : i32
    %c0_i32_1 = arith.constant 0 : i32
    return %c0_i32, %c0_i32_0 : i32, i32
  }
  func.func @transform_2(%arg0: i32) -> (i32, i32) {
    %c0_i32 = arith.constant 0 : i32
    %c0_i32_0 = arith.constant 0 : i32
    %c0_i32_1 = arith.constant 0 : i32
    return %c0_i32, %c0_i32_0 : i32, i32
  }
  func.func @transform_3(%arg0: i32) -> (i32, i32) {
    %c0_i32 = arith.constant 0 : i32
    %c0_i32_0 = arith.constant 0 : i32
    return %arg0, %c0_i32 : i32, i32
  }
}

module attributes {stable_mosaic.version = 11 : i64} {
  func.func @_skip_linear_resident_kernel(%arg0: i32, %arg1: memref<16x128xf32, #tpu.memory_space<vmem>>, %arg2: memref<128x128xf32, #tpu.memory_space<vmem>>, %arg3: memref<1x128xf32, #tpu.memory_space<vmem>>, %arg4: memref<16x128xf32, #tpu.memory_space<vmem>>) attributes {dimension_semantics = [#tpu.dimension_semantics<parallel>], iteration_bounds = array<i64: 1>, scalar_prefetch = 0 : i64, scratch_operands = 0 : i64, tpu.core_type = #tpu.core_type<tc>, window_params = [{transform_indices = @transform_0, window_bounds = array<i64: 16, 128>}, {pipeline_mode = #tpu.pipeline_mode<synchronous>, transform_indices = @transform_1, window_bounds = array<i64: 128, 128>}, {pipeline_mode = #tpu.pipeline_mode<synchronous>, transform_indices = @transform_2, window_bounds = array<i64: 1, 128>}, {transform_indices = @transform_3, window_bounds = array<i64: 16, 128>}]} {
    %c0 = arith.constant 0 : index
    %c0_0 = arith.constant 0 : index
    %0 = vector.load %arg1[%c0, %c0_0] : memref<16x128xf32, #tpu.memory_space<vmem>>, vector<16x128xf32>
    %c0_1 = arith.constant 0 : index
    %c0_2 = arith.constant 0 : index
    %1 = vector.load %arg2[%c0_1, %c0_2] : memref<128x128xf32, #tpu.memory_space<vmem>>, vector<128x128xf32>
    %cst = arith.constant dense<0.000000e+00> : vector<16x128xf32>
    %2 = tpu.matmul %0, %1, %cst {dimension_numbers = #tpu.dot_dimension_numbers<[1], [0], [0], [1], [0, 0, 1, 1], [], []>} : vector<16x128xf32>, vector<128x128xf32>, vector<16x128xf32> -> vector<16x128xf32>
    %c0_3 = arith.constant 0 : index
    %c0_4 = arith.constant 0 : index
    %3 = vector.load %arg3[%c0_3, %c0_4] : memref<1x128xf32, #tpu.memory_space<vmem>>, vector<1x128xf32>
    %4 = vector.broadcast %3 : vector<1x128xf32> to vector<16x128xf32>
    %5 = arith.addf %2, %4 : vector<16x128xf32>
    %6 = arith.addf %5, %0 : vector<16x128xf32>
    %c0_5 = arith.constant 0 : index
    %c0_6 = arith.constant 0 : index
    %7 = vector.load %arg4[%c0_5, %c0_6] : memref<16x128xf32, #tpu.memory_space<vmem>>, vector<16x128xf32>
    tpu.vector_store %arg4[%c0_5, %c0_6], %6 {strides = array<i32>} : memref<16x128xf32, #tpu.memory_space<vmem>>, vector<16x128xf32>,
    return
  }
  func.func @transform_0(%arg0: i32) -> (i32, i32) {
    %c0_i32 = arith.constant 0 : i32
    %c0_i32_0 = arith.constant 0 : i32
    return %arg0, %c0_i32 : i32, i32
  }
  func.func @transform_1(%arg0: i32) -> (i32, i32) {
    %c0_i32 = arith.constant 0 : i32
    %c0_i32_0 = arith.constant 0 : i32
    %c0_i32_1 = arith.constant 0 : i32
    return %c0_i32, %c0_i32_0 : i32, i32
  }
  func.func @transform_2(%arg0: i32) -> (i32, i32) {
    %c0_i32 = arith.constant 0 : i32
    %c0_i32_0 = arith.constant 0 : i32
    %c0_i32_1 = arith.constant 0 : i32
    return %c0_i32, %c0_i32_0 : i32, i32
  }
  func.func @transform_3(%arg0: i32) -> (i32, i32) {
    %c0_i32 = arith.constant 0 : i32
    %c0_i32_0 = arith.constant 0 : i32
    return %arg0, %c0_i32 : i32, i32
  }
}

</mosaic_0001>

<llo_original>
// kernel: tpu_custom_call.1
$region0: #{tpu_custom_call.1}
  #allocation0 [shape = 'u32[]', space=smem, size = 0x4, offset = 0x4, fixed_abs, tag = 'smem constant byte address 0x4 - core index']
  #allocation1 [shape = 'u32[72,128]{1,0:T(1,128)}', space=vmem, size = 0x9000, scoped, tag = 'internal scratch']
  %s0 = inlined_call_operand.hbm [shape: f32[16,128], index: 0, kind: input, shape index: {}]
  %s1 = inlined_call_operand.hbm [shape: f32[128,128], index: 1, kind: input, shape index: {}]
  %s2 = inlined_call_operand.vmem [shape: f32[1,128], index: 2, kind: input, shape index: {}]
  %s3 = inlined_call_operand.hbm [shape: f32[16,128], index: 3, kind: output, shape index: {}]
  %s4 = sld [smem:[#allocation0]]
  $region30: #{tpu_custom_call.1} parent=0
    _
  %s6 = ssub.s32 1, %s4
  %s7 = scalar_select 0, %s6, %s4
  $region1: #{tpu_custom_call.1} parent=0
    #allocation2 [shape = 'u8[8192]{0}', space=vmem, size = 0x2000, scoped, tag = 'input window, operand 0, single buffered']
    #allocation3 [shape = 's32[1]{0}', space=sflag, size = 0x4, scoped, tag = 'scoped memory for tpu_custom_call.1']
    #allocation4 [shape = 's32[1]{0}', space=sflag, size = 0x4, scoped, tag = 'scoped memory for tpu_custom_call.1']
    #allocation5 [shape = 'u8[65536]{0}', space=vmem, size = 0x10000, scoped, tag = 'input window, operand 1, single buffered']
    #allocation6 [shape = 's32[1]{0}', space=sflag, size = 0x4, scoped, tag = 'scoped memory for tpu_custom_call.1']
    #allocation7 [shape = 'u8[8192]{0}', space=vmem, size = 0x2000, scoped, tag = 'output window, operand 0, single buffered']
    %8 = vsyncpa [#allocation3], 0
    %9 = vsyncpa [#allocation6], 0
    %10 = vsyncpa [#allocation4], 0
    // Predicated region
    $region2: #{tpu_custom_call.1} parent=1 // pred_check
      _
    $region3: #{tpu_custom_call.1} parent=1 // pred_check_branch
      %12 = sbr.rel (0) target = $region5
    $region4: #{tpu_custom_call.1} parent=1 // pred_region
      %14 = vsyncadd [#allocation3], 0
      %s15 = sshll.u32 %s0, 4
      %s16 = int_to_ptr.hbm [resolvable:$true] %s15
      %s17 = sshll.u32 [#allocation2], 4
      %s18 = int_to_ptr.vmem [resolvable:$true] %s17
      %23 = dma.hbm_to_vmem [thread:$0]  %s16, 256, %s18, [#allocation3], 128, 128, 8
    $region5: #{tpu_custom_call.1} parent=1 // pred_fallthru
      _
    // Predicated region
    $region6: #{tpu_custom_call.1} parent=1 // pred_check
      _
    $region7: #{tpu_custom_call.1} parent=1 // pred_check_branch
      %25 = sbr.rel (0) target = $region9
    $region8: #{tpu_custom_call.1} parent=1 // pred_region
      %27 = vsyncadd [#allocation6], 0
      %s28 = sshll.u32 %s1, 4
      %s29 = int_to_ptr.hbm [resolvable:$true] %s28
      %s30 = sshll.u32 [#allocation5], 4
      %s31 = int_to_ptr.vmem [resolvable:$true] %s30
      %36 = dma.hbm_to_vmem [thread:$0]  %s29, 2048, %s31, [#allocation6], 128, 128, 8
    $region9: #{tpu_custom_call.1} parent=1 // pred_fallthru
      _
    // Predicated region
    $region10: #{tpu_custom_call.1} parent=1 // pred_check
      _
    $region11: #{tpu_custom_call.1} parent=1 // pred_check_branch
      %38 = sbr.rel (0) target = $region13
    $region12: #{tpu_custom_call.1} parent=1 // pred_region
      _
    $region13: #{tpu_custom_call.1} parent=1 // pred_fallthru
      _
    // Predicated region
    $region14: #{tpu_custom_call.1} parent=1 // pred_check
      _
    $region15: #{tpu_custom_call.1} parent=1 // pred_check_branch
      %40 = sbr.rel (0) target = $region17
    $region16: #{tpu_custom_call.1} parent=1 // pred_region
      %42 = dma.done [#allocation3], 256
    $region17: #{tpu_custom_call.1} parent=1 // pred_fallthru
      _
    // Predicated region
    $region18: #{tpu_custom_call.1} parent=1 // pred_check
      _
    $region19: #{tpu_custom_call.1} parent=1 // pred_check_branch
      %44 = sbr.rel (0) target = $region21
    $region20: #{tpu_custom_call.1} parent=1 // pred_region
      %46 = dma.done [#allocation6], 2048
    $region21: #{tpu_custom_call.1} parent=1 // pred_fallthru
      _
    %v47 = vld [vmem:[#allocation2] sm:$0xff]
    %v48 = vld [vmem:[#allocation2 + $0x8] sm:$0xff]
    %v49 = vld [vmem:[#allocation5] sm:$0xff]
    %v50 = vld [vmem:[#allocation5 + $0x8] sm:$0xff]
    %v51 = vld [vmem:[#allocation5 + $0x10] sm:$0xff]
    %v52 = vld [vmem:[#allocation5 + $0x18] sm:$0xff]
    %v53 = vld [vmem:[#allocation5 + $0x20] sm:$0xff]
    %v54 = vld [vmem:[#allocation5 + $0x28] sm:$0xff]
    %v55 = vld [vmem:[#allocation5 + $0x30] sm:$0xff]
    %v56 = vld [vmem:[#allocation5 + $0x38] sm:$0xff]
    %v57 = vld [vmem:[#allocation5 + $0x40] sm:$0xff]
    %v58 = vld [vmem:[#allocation5 + $0x48] sm:$0xff]
    %v59 = vld [vmem:[#allocation5 + $0x50] sm:$0xff]
    %v60 = vld [vmem:[#allocation5 + $0x58] sm:$0xff]
    %v61 = vld [vmem:[#allocation5 + $0x60] sm:$0xff]
    %v62 = vld [vmem:[#allocation5 + $0x68] sm:$0xff]
    %v63 = vld [vmem:[#allocation5 + $0x70] sm:$0xff]
    %v64 = vld [vmem:[#allocation5 + $0x78] sm:$0xff]
    %v65 = vld [vmem:[%s2] sm:$0x1]
    %v67 = vperm.slane %v65, 0
    %69 = vmatpush.msra.mxu0 %v64
    %70 = vmatpush.msra.mxu0 %v63
    %71 = vmatpush.msra.mxu0 %v62
    %72 = vmatpush.msra.mxu0 %v61
    %73 = vmatpush.msra.mxu0 %v60
    %74 = vmatpush.msra.mxu0 %v59
    %75 = vmatpush.msra.mxu0 %v58
    %76 = vmatpush.msra.mxu0 %v57
    %77 = vmatpush.msra.mxu0 %v56
    %78 = vmatpush.msra.mxu0 %v55
    %79 = vmatpush.msra.mxu0 %v54
    %80 = vmatpush.msra.mxu0 %v53
    %81 = vmatpush.msra.mxu0 %v52
    %82 = vmatpush.msra.mxu0 %v51
    %83 = vmatpush.msra.mxu0 %v50
    %84 = vmatpush.msra.mxu0 %v49
    %85 = vmatmul.f32.gmra.mxu0 %v47
    %v86 = vpop.f32.mrf.mxu0
    %v87 = vadd.f32 %v67, %v86
    %88 = vmatmul.f32.gmra.mxu0 %v48
    %v89 = vpop.f32.mrf.mxu0
    %v90 = vadd.f32 %v67, %v89
    %91 = vdwg.mxu0
    %v92 = vadd.f32 %v87, %v47
    %v93 = vadd.f32 %v90, %v48
    %94 = vst [vmem:[#allocation7] sm:$0xff] %v92
    %95 = vst [vmem:[#allocation7 + $0x8] sm:$0xff] %v93
    // Predicated region
    $region22: #{tpu_custom_call.1} parent=1 // pred_check
      _
    $region23: #{tpu_custom_call.1} parent=1 // pred_check_branch
      %97 = sbr.rel (0) target = $region25
    $region24: #{tpu_custom_call.1} parent=1 // pred_region
      %99 = vsyncadd [#allocation4], 0
      %s100 = sshll.u32 [#allocation7], 4
      %s101 = int_to_ptr.vmem [resolvable:$true] %s100
      %s102 = sshll.u32 %s3, 4
      %s103 = int_to_ptr.hbm [resolvable:$true] %s102
      %108 = dma.vmem_to_hbm [thread:$0]  %s101, 256, %s103, [#allocation4], 128, 128, 8
    $region25: #{tpu_custom_call.1} parent=1 // pred_fallthru
      _
    // Predicated region
    $region26: #{tpu_custom_call.1} parent=1 // pred_check
      _
    $region27: #{tpu_custom_call.1} parent=1 // pred_check_branch
      %110 = sbr.rel (0) target = $region29
    $region28: #{tpu_custom_call.1} parent=1 // pred_region
      %112 = dma.done [#allocation4], 256
    $region29: #{tpu_custom_call.1} parent=1 // pred_fallthru
      _
    %113 = vsyncpa [#allocation3], 1
    %114 = vsyncpa [#allocation6], 1
    %115 = vsyncpa [#allocation4], 1

// kernel: tpu_custom_call.1
$region0: #{tpu_custom_call.1}
  #allocation0 [shape = 'u32[]', space=smem, size = 0x4, offset = 0x4, fixed_abs, tag = 'smem constant byte address 0x4 - core index']
  #allocation1 [shape = 'u32[72,128]{1,0:T(1,128)}', space=vmem, size = 0x9000, scoped, tag = 'internal scratch']
  %s0 = inlined_call_operand.hbm [shape: f32[16,128], index: 0, kind: input, shape index: {}]
  %s1 = inlined_call_operand.hbm [shape: f32[128,128], index: 1, kind: input, shape index: {}]
  %s2 = inlined_call_operand.vmem [shape: f32[1,128], index: 2, kind: input, shape index: {}]
  %s3 = inlined_call_operand.hbm [shape: f32[16,128], index: 3, kind: output, shape index: {}]
  %s4 = sld [smem:[#allocation0]]
  $region30: #{tpu_custom_call.1} parent=0
    _
  %s6 = ssub.s32 1, %s4
  %s7 = scalar_select 0, %s6, %s4
  $region1: #{tpu_custom_call.1} parent=0
    #allocation2 [shape = 'u8[8192]{0}', space=vmem, size = 0x2000, scoped, tag = 'input window, operand 0, single buffered']
    #allocation3 [shape = 's32[1]{0}', space=sflag, size = 0x4, scoped, tag = 'scoped memory for tpu_custom_call.1']
    #allocation4 [shape = 's32[1]{0}', space=sflag, size = 0x4, scoped, tag = 'scoped memory for tpu_custom_call.1']
    #allocation5 [shape = 'u8[65536]{0}', space=vmem, size = 0x10000, scoped, tag = 'input window, operand 1, single buffered']
    #allocation6 [shape = 's32[1]{0}', space=sflag, size = 0x4, scoped, tag = 'scoped memory for tpu_custom_call.1']
    #allocation7 [shape = 'u8[8192]{0}', space=vmem, size = 0x2000, scoped, tag = 'output window, operand 0, single buffered']
    %8 = vsyncpa [#allocation3], 0
    %9 = vsyncpa [#allocation6], 0
    %10 = vsyncpa [#allocation4], 0
    // Predicated region
    $region2: #{tpu_custom_call.1} parent=1 // pred_check
      _
    $region3: #{tpu_custom_call.1} parent=1 // pred_check_branch
      %12 = sbr.rel (0) target = $region5
    $region4: #{tpu_custom_call.1} parent=1 // pred_region
      %14 = vsyncadd [#allocation3], 0
      %s15 = sshll.u32 %s0, 4
      %s16 = int_to_ptr.hbm [resolvable:$true] %s15
      %s17 = sshll.u32 [#allocation2], 4
      %s18 = int_to_ptr.vmem [resolvable:$true] %s17
      %23 = dma.hbm_to_vmem [thread:$0]  %s16, 256, %s18, [#allocation3], 128, 128, 8
    $region5: #{tpu_custom_call.1} parent=1 // pred_fallthru
      _
    // Predicated region
    $region6: #{tpu_custom_call.1} parent=1 // pred_check
      _
    $region7: #{tpu_custom_call.1} parent=1 // pred_check_branch
      %25 = sbr.rel (0) target = $region9
    $region8: #{tpu_custom_call.1} parent=1 // pred_region
      %27 = vsyncadd [#allocation6], 0
      %s28 = sshll.u32 %s1, 4
      %s29 = int_to_ptr.hbm [resolvable:$true] %s28
      %s30 = sshll.u32 [#allocation5], 4
      %s31 = int_to_ptr.vmem [resolvable:$true] %s30
      %36 = dma.hbm_to_vmem [thread:$0]  %s29, 2048, %s31, [#allocation6], 128, 128, 8
    $region9: #{tpu_custom_call.1} parent=1 // pred_fallthru
      _
    // Predicated region
    $region10: #{tpu_custom_call.1} parent=1 // pred_check
      _
    $region11: #{tpu_custom_call.1} parent=1 // pred_check_branch
      %38 = sbr.rel (0) target = $region13
    $region12: #{tpu_custom_call.1} parent=1 // pred_region
      _
    $region13: #{tpu_custom_call.1} parent=1 // pred_fallthru
      _
    // Predicated region
    $region14: #{tpu_custom_call.1} parent=1 // pred_check
      _
    $region15: #{tpu_custom_call.1} parent=1 // pred_check_branch
      %40 = sbr.rel (0) target = $region17
    $region16: #{tpu_custom_call.1} parent=1 // pred_region
      %42 = dma.done [#allocation3], 256
    $region17: #{tpu_custom_call.1} parent=1 // pred_fallthru
      _
    // Predicated region
    $region18: #{tpu_custom_call.1} parent=1 // pred_check
      _
    $region19: #{tpu_custom_call.1} parent=1 // pred_check_branch
      %44 = sbr.rel (0) target = $region21
    $region20: #{tpu_custom_call.1} parent=1 // pred_region
      %46 = dma.done [#allocation6], 2048
    $region21: #{tpu_custom_call.1} parent=1 // pred_fallthru
      _
    %v47 = vld [vmem:[#allocation2] sm:$0xff]
    %v48 = vld [vmem:[#allocation2 + $0x8] sm:$0xff]
    %v49 = vld [vmem:[#allocation5] sm:$0xff]
    %v50 = vld [vmem:[#allocation5 + $0x8] sm:$0xff]
    %v51 = vld [vmem:[#allocation5 + $0x10] sm:$0xff]
    %v52 = vld [vmem:[#allocation5 + $0x18] sm:$0xff]
    %v53 = vld [vmem:[#allocation5 + $0x20] sm:$0xff]
    %v54 = vld [vmem:[#allocation5 + $0x28] sm:$0xff]
    %v55 = vld [vmem:[#allocation5 + $0x30] sm:$0xff]
    %v56 = vld [vmem:[#allocation5 + $0x38] sm:$0xff]
    %v57 = vld [vmem:[#allocation5 + $0x40] sm:$0xff]
    %v58 = vld [vmem:[#allocation5 + $0x48] sm:$0xff]
    %v59 = vld [vmem:[#allocation5 + $0x50] sm:$0xff]
    %v60 = vld [vmem:[#allocation5 + $0x58] sm:$0xff]
    %v61 = vld [vmem:[#allocation5 + $0x60] sm:$0xff]
    %v62 = vld [vmem:[#allocation5 + $0x68] sm:$0xff]
    %v63 = vld [vmem:[#allocation5 + $0x70] sm:$0xff]
    %v64 = vld [vmem:[#allocation5 + $0x78] sm:$0xff]
    %v65 = vld [vmem:[%s2] sm:$0x1]
    %v67 = vperm.slane %v65, 0
    %69 = vmatpush.msra.mxu0 %v64
    %70 = vmatpush.msra.mxu0 %v63
    %71 = vmatpush.msra.mxu0 %v62
    %72 = vmatpush.msra.mxu0 %v61
    %73 = vmatpush.msra.mxu0 %v60
    %74 = vmatpush.msra.mxu0 %v59
    %75 = vmatpush.msra.mxu0 %v58
    %76 = vmatpush.msra.mxu0 %v57
    %77 = vmatpush.msra.mxu0 %v56
    %78 = vmatpush.msra.mxu0 %v55
    %79 = vmatpush.msra.mxu0 %v54
    %80 = vmatpush.msra.mxu0 %v53
    %81 = vmatpush.msra.mxu0 %v52
    %82 = vmatpush.msra.mxu0 %v51
    %83 = vmatpush.msra.mxu0 %v50
    %84 = vmatpush.msra.mxu0 %v49
    %85 = vmatmul.f32.gmra.mxu0 %v47
    %v86 = vpop.f32.mrf.mxu0
    %v87 = vadd.f32 %v67, %v86
    %88 = vmatmul.f32.gmra.mxu0 %v48
    %v89 = vpop.f32.mrf.mxu0
    %v90 = vadd.f32 %v67, %v89
    %91 = vdwg.mxu0
    %v92 = vadd.f32 %v87, %v47
    %v93 = vadd.f32 %v90, %v48
    %94 = vst [vmem:[#allocation7] sm:$0xff] %v92
    %95 = vst [vmem:[#allocation7 + $0x8] sm:$0xff] %v93
    // Predicated region
    $region22: #{tpu_custom_call.1} parent=1 // pred_check
      _
    $region23: #{tpu_custom_call.1} parent=1 // pred_check_branch
      %97 = sbr.rel (0) target = $region25
    $region24: #{tpu_custom_call.1} parent=1 // pred_region
      %99 = vsyncadd [#allocation4], 0
      %s100 = sshll.u32 [#allocation7], 4
      %s101 = int_to_ptr.vmem [resolvable:$true] %s100
      %s102 = sshll.u32 %s3, 4
      %s103 = int_to_ptr.hbm [resolvable:$true] %s102
      %108 = dma.vmem_to_hbm [thread:$0]  %s101, 256, %s103, [#allocation4], 128, 128, 8
    $region25: #{tpu_custom_call.1} parent=1 // pred_fallthru
      _
    // Predicated region
    $region26: #{tpu_custom_call.1} parent=1 // pred_check
      _
    $region27: #{tpu_custom_call.1} parent=1 // pred_check_branch
      %110 = sbr.rel (0) target = $region29
    $region28: #{tpu_custom_call.1} parent=1 // pred_region
      %112 = dma.done [#allocation4], 256
    $region29: #{tpu_custom_call.1} parent=1 // pred_fallthru
      _
    %113 = vsyncpa [#allocation3], 1
    %114 = vsyncpa [#allocation6], 1
    %115 = vsyncpa [#allocation4], 1

</llo_original>
